<compile_context>
chip_gen: v7x
topology: tpu7x:2x2x1
jax: 0.10.0
libtpu: 0.0.40
codegen_flags: <defaults>
</compile_context>

<pallas_src>
import jax
import jax.numpy as jnp
import numpy as np
from jax.experimental import pallas as pl
from jax.experimental.pallas import tpu as pltpu  # noqa: F401  (TPU backend module)

P_DROP = 0.1
# Integer-domain dropout threshold: for uniform uint32 bits, P(bits < T) == P_DROP.
DROP_THRESHOLD = np.uint32(round(P_DROP * (1 << 32)))
SCALE = np.float32(1.0 / (1.0 - P_DROP))


def dropout_add_kernel(x_ref, res_ref, bits_ref, o_ref):
    """Single full-array block: out = where(keep, x/(1-p), 0) + res."""
    keep = bits_ref[...] >= DROP_THRESHOLD                      # pure integer compare
    dropped = jnp.where(keep, x_ref[...] * SCALE, jnp.float32(0.0))
    o_ref[...] = (dropped + res_ref[...]).astype(o_ref.dtype)


@jax.jit
def dropout_add(x, residual, key):
    """x, residual: (B, S, H) float32. Returns dropout(x, p=0.1) + residual."""
    orig_shape = x.shape
    total = x.size
    # Present a lane-dense slab: widest last dim (multiple of 128) that divides N.
    lane = 1024 if total % 1024 == 0 else orig_shape[-1]
    rows = total // lane
    x2 = x.reshape(rows, lane)
    r2 = residual.reshape(rows, lane)
    bits = jax.random.bits(key, (rows, lane), dtype=jnp.uint32)

    # No grid: the whole (rows, lane) array is one block resident in VMEM
    # (x + res + bits + out ≈ 1.5 MiB, far below VMEM on every generation),
    # so there is no per-step pipelining overhead at all.
    out2 = pl.pallas_call(
        dropout_add_kernel,
        out_shape=jax.ShapeDtypeStruct((rows, lane), x.dtype),
    )(x2, r2, bits)
    return out2.reshape(orig_shape)


if __name__ == "__main__":
    key = jax.random.PRNGKey(0)
    k1, k2, k3 = jax.random.split(key, 3)
    # Shapes from the PyTorch module: x272, x239 are (1, 384, 256)
    x272 = jax.random.normal(k1, (1, 384, 256), dtype=jnp.float32)
    x239 = jax.random.normal(k2, (1, 384, 256), dtype=jnp.float32)

    out = dropout_add(x272, x239, k3)
    out = jax.block_until_ready(out)

    # Sanity checks: every output element is either residual (dropped) or
    # x/(1-p) + residual (kept), and the empirical drop rate is ~p.
    kept_val = x272 * (1.0 / (1.0 - P_DROP)) + x239
    is_dropped = jnp.isclose(out, x239, atol=1e-5)
    is_kept = jnp.isclose(out, kept_val, atol=1e-5)
    assert bool(jnp.all(is_dropped | is_kept)), "output inconsistent with dropout+add"
    drop_rate = float(jnp.mean(is_dropped & ~is_kept))
    assert abs(drop_rate - P_DROP) < 0.03, f"unexpected drop rate {drop_rate}"

    print("KERNEL_OK")
</pallas_src>

<mosaic_0001>
module attributes {stable_mosaic.version = 11 : i64} {
  func.func @dropout_add_kernel(%arg0: memref<96x1024xf32, #tpu.memory_space<vmem>>, %arg1: memref<96x1024xf32, #tpu.memory_space<vmem>>, %arg2: memref<96x1024xi32, #tpu.memory_space<vmem>>, %arg3: memref<96x1024xf32, #tpu.memory_space<vmem>>) attributes {dimension_semantics = [], scalar_prefetch = 0 : i64, scratch_operands = 0 : i64, tpu.core_type = #tpu.core_type<tc>} {
    %c0 = arith.constant 0 : index
    %c0_0 = arith.constant 0 : index
    %0 = vector.load %arg2[%c0, %c0_0] : memref<96x1024xi32, #tpu.memory_space<vmem>>, vector<96x1024xi32>
    %c429496730_i32 = arith.constant 429496730 : i32
    %1 = vector.broadcast %c429496730_i32 : i32 to vector<96x1024xi32>
    %2 = arith.cmpi uge, %0, %1 : vector<96x1024xi32>
    %c0_1 = arith.constant 0 : index
    %c0_2 = arith.constant 0 : index
    %3 = vector.load %arg0[%c0_1, %c0_2] : memref<96x1024xf32, #tpu.memory_space<vmem>>, vector<96x1024xf32>
    %cst = arith.constant 1.11111116 : f32
    %4 = vector.broadcast %cst : f32 to vector<96x1024xf32>
    %5 = arith.mulf %3, %4 : vector<96x1024xf32>
    %cst_3 = arith.constant 0.000000e+00 : f32
    %6 = vector.broadcast %cst_3 : f32 to vector<96x1024xf32>
    %7 = arith.select %2, %5, %6 : vector<96x1024xi1>, vector<96x1024xf32>
    %c0_4 = arith.constant 0 : index
    %c0_5 = arith.constant 0 : index
    %8 = vector.load %arg1[%c0_4, %c0_5] : memref<96x1024xf32, #tpu.memory_space<vmem>>, vector<96x1024xf32>
    %9 = arith.addf %7, %8 : vector<96x1024xf32>
    %c0_6 = arith.constant 0 : index
    %c0_7 = arith.constant 0 : index
    %10 = vector.load %arg3[%c0_6, %c0_7] : memref<96x1024xf32, #tpu.memory_space<vmem>>, vector<96x1024xf32>
    tpu.vector_store %arg3[%c0_6, %c0_7], %9 {strides = array<i32>} : memref<96x1024xf32, #tpu.memory_space<vmem>>, vector<96x1024xf32>,
    return
  }
}

</mosaic_0001>

<llo_original>
// kernel: dropout_add.1
$region0: #{dropout_add.1}
  #allocation0 [shape = 'u32[]', space=smem, size = 0x4, offset = 0x4, fixed_abs, tag = 'smem constant byte address 0x4 - core index']
  #allocation1 [shape = 'u32[144,128]{1,0:T(1,128)}', space=vmem, size = 0x12000, scoped, tag = 'internal scratch']
  %s0 = inlined_call_operand.vmem [shape: f32[96,1024], index: 0, kind: input, shape index: {}]
  %s1 = inlined_call_operand.vmem [shape: f32[96,1024], index: 1, kind: input, shape index: {}]
  %s2 = inlined_call_operand.vmem [shape: u32[96,1024], index: 2, kind: input, shape index: {}]
  %s3 = inlined_call_operand.vmem [shape: f32[96,1024], index: 3, kind: output, shape index: {}]
  %s4 = sld [smem:[#allocation0]]
  $region22: #{dropout_add.1} parent=0
    _
  %s6 = ssub.s32 1, %s4
  %s7 = scalar_select 0, %s6, %s4
  // Predicated region
  $region2: #{dropout_add.1} parent=0 // pred_check
    _
  $region3: #{dropout_add.1} parent=0 // pred_check_branch
    %9 = sbr.rel (0) target = $region5
  $region4: #{dropout_add.1} parent=0 // pred_region
    _
  $region5: #{dropout_add.1} parent=0 // pred_fallthru
    _
  // Predicated region
  $region6: #{dropout_add.1} parent=0 // pred_check
    _
  $region7: #{dropout_add.1} parent=0 // pred_check_branch
    %11 = sbr.rel (0) target = $region9
  $region8: #{dropout_add.1} parent=0 // pred_region
    _
  $region9: #{dropout_add.1} parent=0 // pred_fallthru
    _
  // Predicated region
  $region10: #{dropout_add.1} parent=0 // pred_check
    _
  $region11: #{dropout_add.1} parent=0 // pred_check_branch
    %13 = sbr.rel (0) target = $region13
  $region12: #{dropout_add.1} parent=0 // pred_region
    _
  $region13: #{dropout_add.1} parent=0 // pred_fallthru
    _
  %v14 = vld [vmem:[%s2] sm:$0xff]
  %v15 = vld [vmem:[%s2 + $0x8] sm:$0xff]
  %v16 = vld [vmem:[%s2 + $0x10] sm:$0xff]
  %v17 = vld [vmem:[%s2 + $0x18] sm:$0xff]
  %v18 = vld [vmem:[%s2 + $0x20] sm:$0xff]
  %v19 = vld [vmem:[%s2 + $0x28] sm:$0xff]
  %v20 = vld [vmem:[%s2 + $0x30] sm:$0xff]
  %v21 = vld [vmem:[%s2 + $0x38] sm:$0xff]
  %v22 = vld [vmem:[%s2 + $0x40] sm:$0xff]
  %v23 = vld [vmem:[%s2 + $0x48] sm:$0xff]
  %v24 = vld [vmem:[%s2 + $0x50] sm:$0xff]
  %v25 = vld [vmem:[%s2 + $0x58] sm:$0xff]
  %v26 = vld [vmem:[%s2 + $0x60] sm:$0xff]
  %v27 = vld [vmem:[%s2 + $0x68] sm:$0xff]
  %v28 = vld [vmem:[%s2 + $0x70] sm:$0xff]
  %v29 = vld [vmem:[%s2 + $0x78] sm:$0xff]
  %v30 = vld [vmem:[%s2 + $0x80] sm:$0xff]
  %v31 = vld [vmem:[%s2 + $0x88] sm:$0xff]
  %v32 = vld [vmem:[%s2 + $0x90] sm:$0xff]
  %v33 = vld [vmem:[%s2 + $0x98] sm:$0xff]
  %v34 = vld [vmem:[%s2 + $0xa0] sm:$0xff]
  %v35 = vld [vmem:[%s2 + $0xa8] sm:$0xff]
  %v36 = vld [vmem:[%s2 + $0xb0] sm:$0xff]
  %v37 = vld [vmem:[%s2 + $0xb8] sm:$0xff]
  %v38 = vld [vmem:[%s2 + $0xc0] sm:$0xff]
  %v39 = vld [vmem:[%s2 + $0xc8] sm:$0xff]
  %v40 = vld [vmem:[%s2 + $0xd0] sm:$0xff]
  %v41 = vld [vmem:[%s2 + $0xd8] sm:$0xff]
  %v42 = vld [vmem:[%s2 + $0xe0] sm:$0xff]
  %v43 = vld [vmem:[%s2 + $0xe8] sm:$0xff]
  %v44 = vld [vmem:[%s2 + $0xf0] sm:$0xff]
  %v45 = vld [vmem:[%s2 + $0xf8] sm:$0xff]
  %v46 = vld [vmem:[%s2 + $0x100] sm:$0xff]
  %v47 = vld [vmem:[%s2 + $0x108] sm:$0xff]
  %v48 = vld [vmem:[%s2 + $0x110] sm:$0xff]
  %v49 = vld [vmem:[%s2 + $0x118] sm:$0xff]
  %v50 = vld [vmem:[%s2 + $0x120] sm:$0xff]
  %v51 = vld [vmem:[%s2 + $0x128] sm:$0xff]
  %v52 = vld [vmem:[%s2 + $0x130] sm:$0xff]
  %v53 = vld [vmem:[%s2 + $0x138] sm:$0xff]
  %v54 = vld [vmem:[%s2 + $0x140] sm:$0xff]
  %v55 = vld [vmem:[%s2 + $0x148] sm:$0xff]
  %v56 = vld [vmem:[%s2 + $0x150] sm:$0xff]
  %v57 = vld [vmem:[%s2 + $0x158] sm:$0xff]
  %v58 = vld [vmem:[%s2 + $0x160] sm:$0xff]
  %v59 = vld [vmem:[%s2 + $0x168] sm:$0xff]
  %v60 = vld [vmem:[%s2 + $0x170] sm:$0xff]
  %v61 = vld [vmem:[%s2 + $0x178] sm:$0xff]
  %v62 = vld [vmem:[%s2 + $0x180] sm:$0xff]
  %v63 = vld [vmem:[%s2 + $0x188] sm:$0xff]
  %v64 = vld [vmem:[%s2 + $0x190] sm:$0xff]
  %v65 = vld [vmem:[%s2 + $0x198] sm:$0xff]
  %v66 = vld [vmem:[%s2 + $0x1a0] sm:$0xff]
  %v67 = vld [vmem:[%s2 + $0x1a8] sm:$0xff]
  %v68 = vld [vmem:[%s2 + $0x1b0] sm:$0xff]
  %v69 = vld [vmem:[%s2 + $0x1b8] sm:$0xff]
  %v70 = vld [vmem:[%s2 + $0x1c0] sm:$0xff]
  %v71 = vld [vmem:[%s2 + $0x1c8] sm:$0xff]
  %v72 = vld [vmem:[%s2 + $0x1d0] sm:$0xff]
  %v73 = vld [vmem:[%s2 + $0x1d8] sm:$0xff]
  %v74 = vld [vmem:[%s2 + $0x1e0] sm:$0xff]
  %v75 = vld [vmem:[%s2 + $0x1e8] sm:$0xff]
  %v76 = vld [vmem:[%s2 + $0x1f0] sm:$0xff]
  %v77 = vld [vmem:[%s2 + $0x1f8] sm:$0xff]
  %v78 = vld [vmem:[%s2 + $0x200] sm:$0xff]
  %v79 = vld [vmem:[%s2 + $0x208] sm:$0xff]
  %v80 = vld [vmem:[%s2 + $0x210] sm:$0xff]
  %v81 = vld [vmem:[%s2 + $0x218] sm:$0xff]
  %v82 = vld [vmem:[%s2 + $0x220] sm:$0xff]
  %v83 = vld [vmem:[%s2 + $0x228] sm:$0xff]
  %v84 = vld [vmem:[%s2 + $0x230] sm:$0xff]
  %v85 = vld [vmem:[%s2 + $0x238] sm:$0xff]
  %v86 = vld [vmem:[%s2 + $0x240] sm:$0xff]
  %v87 = vld [vmem:[%s2 + $0x248] sm:$0xff]
  %v88 = vld [vmem:[%s2 + $0x250] sm:$0xff]
  %v89 = vld [vmem:[%s2 + $0x258] sm:$0xff]
  %v90 = vld [vmem:[%s2 + $0x260] sm:$0xff]
  %v91 = vld [vmem:[%s2 + $0x268] sm:$0xff]
  %v92 = vld [vmem:[%s2 + $0x270] sm:$0xff]
  %v93 = vld [vmem:[%s2 + $0x278] sm:$0xff]
  %v94 = vld [vmem:[%s2 + $0x280] sm:$0xff]
  %v95 = vld [vmem:[%s2 + $0x288] sm:$0xff]
  %v96 = vld [vmem:[%s2 + $0x290] sm:$0xff]
  %v97 = vld [vmem:[%s2 + $0x298] sm:$0xff]
  %v98 = vld [vmem:[%s2 + $0x2a0] sm:$0xff]
  %v99 = vld [vmem:[%s2 + $0x2a8] sm:$0xff]
  %v100 = vld [vmem:[%s2 + $0x2b0] sm:$0xff]
  %v101 = vld [vmem:[%s2 + $0x2b8] sm:$0xff]
  %v102 = vld [vmem:[%s2 + $0x2c0] sm:$0xff]
  %v103 = vld [vmem:[%s2 + $0x2c8] sm:$0xff]
  %v104 = vld [vmem:[%s2 + $0x2d0] sm:$0xff]
  %v105 = vld [vmem:[%s2 + $0x2d8] sm:$0xff]
  %v106 = vld [vmem:[%s2 + $0x2e0] sm:$0xff]
  %v107 = vld [vmem:[%s2 + $0x2e8] sm:$0xff]
  %v108 = vld [vmem:[%s2 + $0x2f0] sm:$0xff]
  %v109 = vld [vmem:[%s2 + $0x2f8] sm:$0xff]
  %vm110 = vcmp.ge.u32.totalorder %v14, 429496730
  %vm111 = vcmp.ge.u32.totalorder %v15, 429496730
  %vm112 = vcmp.ge.u32.totalorder %v16, 429496730
  %vm113 = vcmp.ge.u32.totalorder %v17, 429496730
  %vm114 = vcmp.ge.u32.totalorder %v18, 429496730
  %vm115 = vcmp.ge.u32.totalorder %v19, 429496730
  %vm116 = vcmp.ge.u32.totalorder %v20, 429496730
  %vm117 = vcmp.ge.u32.totalorder %v21, 429496730
  %vm118 = vcmp.ge.u32.totalorder %v22, 429496730
  %vm119 = vcmp.ge.u32.totalorder %v23, 429496730
  %vm120 = vcmp.ge.u32.totalorder %v24, 429496730
  %vm121 = vcmp.ge.u32.totalorder %v25, 429496730
  %vm122 = vcmp.ge.u32.totalorder %v26, 429496730
  %vm123 = vcmp.ge.u32.totalorder %v27, 429496730
  %vm124 = vcmp.ge.u32.totalorder %v28, 429496730
  %vm125 = vcmp.ge.u32.totalorder %v29, 429496730
  %vm126 = vcmp.ge.u32.totalorder %v30, 429496730
  %vm127 = vcmp.ge.u32.totalorder %v31, 429496730
  %vm128 = vcmp.ge.u32.totalorder %v32, 429496730
  %vm129 = vcmp.ge.u32.totalorder %v33, 429496730
  %vm130 = vcmp.ge.u32.totalorder %v34, 429496730
  %vm131 = vcmp.ge.u32.totalorder %v35, 429496730
  %vm132 = vcmp.ge.u32.totalorder %v36, 429496730
  %vm133 = vcmp.ge.u32.totalorder %v37, 429496730
  %vm134 = vcmp.ge.u32.totalorder %v38, 429496730
  %vm135 = vcmp.ge.u32.totalorder %v39, 429496730
  %vm136 = vcmp.ge.u32.totalorder %v40, 429496730
  %vm137 = vcmp.ge.u32.totalorder %v41, 429496730
  %vm138 = vcmp.ge.u32.totalorder %v42, 429496730
  %vm139 = vcmp.ge.u32.totalorder %v43, 429496730
  %vm140 = vcmp.ge.u32.totalorder %v44, 429496730
  %vm141 = vcmp.ge.u32.totalorder %v45, 429496730
  %vm142 = vcmp.ge.u32.totalorder %v46, 429496730
  %vm143 = vcmp.ge.u32.totalorder %v47, 429496730
  %vm144 = vcmp.ge.u32.totalorder %v48, 429496730
  %vm145 = vcmp.ge.u32.totalorder %v49, 429496730
  %vm146 = vcmp.ge.u32.totalorder %v50, 429496730
  %vm147 = vcmp.ge.u32.totalorder %v51, 429496730
  %vm148 = vcmp.ge.u32.totalorder %v52, 429496730
  %vm149 = vcmp.ge.u32.totalorder %v53, 429496730
  %vm150 = vcmp.ge.u32.totalorder %v54, 429496730
  %vm151 = vcmp.ge.u32.totalorder %v55, 429496730
  %vm152 = vcmp.ge.u32.totalorder %v56, 429496730
  %vm153 = vcmp.ge.u32.totalorder %v57, 429496730
  %vm154 = vcmp.ge.u32.totalorder %v58, 429496730
  %vm155 = vcmp.ge.u32.totalorder %v59, 429496730
  %vm156 = vcmp.ge.u32.totalorder %v60, 429496730
  %vm157 = vcmp.ge.u32.totalorder %v61, 429496730
  %vm158 = vcmp.ge.u32.totalorder %v62, 429496730
  %vm159 = vcmp.ge.u32.totalorder %v63, 429496730
  %vm160 = vcmp.ge.u32.totalorder %v64, 429496730
  %vm161 = vcmp.ge.u32.totalorder %v65, 429496730
  %vm162 = vcmp.ge.u32.totalorder %v66, 429496730
  %vm163 = vcmp.ge.u32.totalorder %v67, 429496730
  %vm164 = vcmp.ge.u32.totalorder %v68, 429496730
  %vm165 = vcmp.ge.u32.totalorder %v69, 429496730
  %vm166 = vcmp.ge.u32.totalorder %v70, 429496730
  %vm167 = vcmp.ge.u32.totalorder %v71, 429496730
  %vm168 = vcmp.ge.u32.totalorder %v72, 429496730
  %vm169 = vcmp.ge.u32.totalorder %v73, 429496730
  %vm170 = vcmp.ge.u32.totalorder %v74, 429496730
  %vm171 = vcmp.ge.u32.totalorder %v75, 429496730
  %vm172 = vcmp.ge.u32.totalorder %v76, 429496730
  %vm173 = vcmp.ge.u32.totalorder %v77, 429496730
  %vm174 = vcmp.ge.u32.totalorder %v78, 429496730
  %vm175 = vcmp.ge.u32.totalorder %v79, 429496730
  %vm176 = vcmp.ge.u32.totalorder %v80, 429496730
  %vm177 = vcmp.ge.u32.totalorder %v81, 429496730
  %vm178 = vcmp.ge.u32.totalorder %v82, 429496730
  %vm179 = vcmp.ge.u32.totalorder %v83, 429496730
  %vm180 = vcmp.ge.u32.totalorder %v84, 429496730
  %vm181 = vcmp.ge.u32.totalorder %v85, 429496730
  %vm182 = vcmp.ge.u32.totalorder %v86, 429496730
  %vm183 = vcmp.ge.u32.totalorder %v87, 429496730
  %vm184 = vcmp.ge.u32.totalorder %v88, 429496730
  %vm185 = vcmp.ge.u32.totalorder %v89, 429496730
  %vm186 = vcmp.ge.u32.totalorder %v90, 429496730
  %vm187 = vcmp.ge.u32.totalorder %v91, 429496730
  %vm188 = vcmp.ge.u32.totalorder %v92, 429496730
  %vm189 = vcmp.ge.u32.totalorder %v93, 429496730
  %vm190 = vcmp.ge.u32.totalorder %v94, 429496730
  %vm191 = vcmp.ge.u32.totalorder %v95, 429496730
  %vm192 = vcmp.ge.u32.totalorder %v96, 429496730
  %vm193 = vcmp.ge.u32.totalorder %v97, 429496730
  %vm194 = vcmp.ge.u32.totalorder %v98, 429496730
  %vm195 = vcmp.ge.u32.totalorder %v99, 429496730
  %vm196 = vcmp.ge.u32.totalorder %v100, 429496730
  %vm197 = vcmp.ge.u32.totalorder %v101, 429496730
  %vm198 = vcmp.ge.u32.totalorder %v102, 429496730
  %vm199 = vcmp.ge.u32.totalorder %v103, 429496730
  %vm200 = vcmp.ge.u32.totalorder %v104, 429496730
  %vm201 = vcmp.ge.u32.totalorder %v105, 429496730
  %vm202 = vcmp.ge.u32.totalorder %v106, 429496730
  %vm203 = vcmp.ge.u32.totalorder %v107, 429496730
  %vm204 = vcmp.ge.u32.totalorder %v108, 429496730
  %vm205 = vcmp.ge.u32.totalorder %v109, 429496730
  %v206 = vld [vmem:[%s0] sm:$0xff]
  %v207 = vld [vmem:[%s0 + $0x8] sm:$0xff]
  %v208 = vld [vmem:[%s0 + $0x10] sm:$0xff]
  %v209 = vld [vmem:[%s0 + $0x18] sm:$0xff]
  %v210 = vld [vmem:[%s0 + $0x20] sm:$0xff]
  %v211 = vld [vmem:[%s0 + $0x28] sm:$0xff]
  %v212 = vld [vmem:[%s0 + $0x30] sm:$0xff]
  %v213 = vld [vmem:[%s0 + $0x38] sm:$0xff]
  %v214 = vld [vmem:[%s0 + $0x40] sm:$0xff]
  %v215 = vld [vmem:[%s0 + $0x48] sm:$0xff]
  %v216 = vld [vmem:[%s0 + $0x50] sm:$0xff]
  %v217 = vld [vmem:[%s0 + $0x58] sm:$0xff]
  %v218 = vld [vmem:[%s0 + $0x60] sm:$0xff]
  %v219 = vld [vmem:[%s0 + $0x68] sm:$0xff]
  %v220 = vld [vmem:[%s0 + $0x70] sm:$0xff]
  %v221 = vld [vmem:[%s0 + $0x78] sm:$0xff]
  %v222 = vld [vmem:[%s0 + $0x80] sm:$0xff]
  %v223 = vld [vmem:[%s0 + $0x88] sm:$0xff]
  %v224 = vld [vmem:[%s0 + $0x90] sm:$0xff]
  %v225 = vld [vmem:[%s0 + $0x98] sm:$0xff]
  %v226 = vld [vmem:[%s0 + $0xa0] sm:$0xff]
  %v227 = vld [vmem:[%s0 + $0xa8] sm:$0xff]
  %v228 = vld [vmem:[%s0 + $0xb0] sm:$0xff]
  %v229 = vld [vmem:[%s0 + $0xb8] sm:$0xff]
  %v230 = vld [vmem:[%s0 + $0xc0] sm:$0xff]
  %v231 = vld [vmem:[%s0 + $0xc8] sm:$0xff]
  %v232 = vld [vmem:[%s0 + $0xd0] sm:$0xff]
  %v233 = vld [vmem:[%s0 + $0xd8] sm:$0xff]
  %v234 = vld [vmem:[%s0 + $0xe0] sm:$0xff]
  %v235 = vld [vmem:[%s0 + $0xe8] sm:$0xff]
  %v236 = vld [vmem:[%s0 + $0xf0] sm:$0xff]
  %v237 = vld [vmem:[%s0 + $0xf8] sm:$0xff]
  %v238 = vld [vmem:[%s0 + $0x100] sm:$0xff]
  %v239 = vld [vmem:[%s0 + $0x108] sm:$0xff]
  %v240 = vld [vmem:[%s0 + $0x110] sm:$0xff]
  %v241 = vld [vmem:[%s0 + $0x118] sm:$0xff]
  %v242 = vld [vmem:[%s0 + $0x120] sm:$0xff]
  %v243 = vld [vmem:[%s0 + $0x128] sm:$0xff]
  %v244 = vld [vmem:[%s0 + $0x130] sm:$0xff]
  %v245 = vld [vmem:[%s0 + $0x138] sm:$0xff]
  %v246 = vld [vmem:[%s0 + $0x140] sm:$0xff]
  %v247 = vld [vmem:[%s0 + $0x148] sm:$0xff]
  %v248 = vld [vmem:[%s0 + $0x150] sm:$0xff]
  %v249 = vld [vmem:[%s0 + $0x158] sm:$0xff]
  %v250 = vld [vmem:[%s0 + $0x160] sm:$0xff]
  %v251 = vld [vmem:[%s0 + $0x168] sm:$0xff]
  %v252 = vld [vmem:[%s0 + $0x170] sm:$0xff]
  %v253 = vld [vmem:[%s0 + $0x178] sm:$0xff]
  %v254 = vld [vmem:[%s0 + $0x180] sm:$0xff]
  %v255 = vld [vmem:[%s0 + $0x188] sm:$0xff]
  %v256 = vld [vmem:[%s0 + $0x190] sm:$0xff]
  %v257 = vld [vmem:[%s0 + $0x198] sm:$0xff]
  %v258 = vld [vmem:[%s0 + $0x1a0] sm:$0xff]
  %v259 = vld [vmem:[%s0 + $0x1a8] sm:$0xff]
  %v260 = vld [vmem:[%s0 + $0x1b0] sm:$0xff]
  %v261 = vld [vmem:[%s0 + $0x1b8] sm:$0xff]
  %v262 = vld [vmem:[%s0 + $0x1c0] sm:$0xff]
  %v263 = vld [vmem:[%s0 + $0x1c8] sm:$0xff]
  %v264 = vld [vmem:[%s0 + $0x1d0] sm:$0xff]
  %v265 = vld [vmem:[%s0 + $0x1d8] sm:$0xff]
  %v266 = vld [vmem:[%s0 + $0x1e0] sm:$0xff]
  %v267 = vld [vmem:[%s0 + $0x1e8] sm:$0xff]
  %v268 = vld [vmem:[%s0 + $0x1f0] sm:$0xff]
  %v269 = vld [vmem:[%s0 + $0x1f8] sm:$0xff]
  %v270 = vld [vmem:[%s0 + $0x200] sm:$0xff]
  %v271 = vld [vmem:[%s0 + $0x208] sm:$0xff]
  %v272 = vld [vmem:[%s0 + $0x210] sm:$0xff]
  %v273 = vld [vmem:[%s0 + $0x218] sm:$0xff]
  %v274 = vld [vmem:[%s0 + $0x220] sm:$0xff]
  %v275 = vld [vmem:[%s0 + $0x228] sm:$0xff]
  %v276 = vld [vmem:[%s0 + $0x230] sm:$0xff]
  %v277 = vld [vmem:[%s0 + $0x238] sm:$0xff]
  %v278 = vld [vmem:[%s0 + $0x240] sm:$0xff]
  %v279 = vld [vmem:[%s0 + $0x248] sm:$0xff]
  %v280 = vld [vmem:[%s0 + $0x250] sm:$0xff]
  %v281 = vld [vmem:[%s0 + $0x258] sm:$0xff]
  %v282 = vld [vmem:[%s0 + $0x260] sm:$0xff]
  %v283 = vld [vmem:[%s0 + $0x268] sm:$0xff]
  %v284 = vld [vmem:[%s0 + $0x270] sm:$0xff]
  %v285 = vld [vmem:[%s0 + $0x278] sm:$0xff]
  %v286 = vld [vmem:[%s0 + $0x280] sm:$0xff]
  %v287 = vld [vmem:[%s0 + $0x288] sm:$0xff]
  %v288 = vld [vmem:[%s0 + $0x290] sm:$0xff]
  %v289 = vld [vmem:[%s0 + $0x298] sm:$0xff]
  %v290 = vld [vmem:[%s0 + $0x2a0] sm:$0xff]
  %v291 = vld [vmem:[%s0 + $0x2a8] sm:$0xff]
  %v292 = vld [vmem:[%s0 + $0x2b0] sm:$0xff]
  %v293 = vld [vmem:[%s0 + $0x2b8] sm:$0xff]
  %v294 = vld [vmem:[%s0 + $0x2c0] sm:$0xff]
  %v295 = vld [vmem:[%s0 + $0x2c8] sm:$0xff]
  %v296 = vld [vmem:[%s0 + $0x2d0] sm:$0xff]
  %v297 = vld [vmem:[%s0 + $0x2d8] sm:$0xff]
  %v298 = vld [vmem:[%s0 + $0x2e0] sm:$0xff]
  %v299 = vld [vmem:[%s0 + $0x2e8] sm:$0xff]
  %v300 = vld [vmem:[%s0 + $0x2f0] sm:$0xff]
  %v301 = vld [vmem:[%s0 + $0x2f8] sm:$0xff]
  %v302 = vmul.f32 %v206, 1.1111112
  %v303 = vmul.f32 %v207, 1.1111112
  %v304 = vmul.f32 %v208, 1.1111112
  %v305 = vmul.f32 %v209, 1.1111112
  %v306 = vmul.f32 %v210, 1.1111112
  %v307 = vmul.f32 %v211, 1.1111112
  %v308 = vmul.f32 %v212, 1.1111112
  %v309 = vmul.f32 %v213, 1.1111112
  %v310 = vmul.f32 %v214, 1.1111112
  %v311 = vmul.f32 %v215, 1.1111112
  %v312 = vmul.f32 %v216, 1.1111112
  %v313 = vmul.f32 %v217, 1.1111112
  %v314 = vmul.f32 %v218, 1.1111112
  %v315 = vmul.f32 %v219, 1.1111112
  %v316 = vmul.f32 %v220, 1.1111112
  %v317 = vmul.f32 %v221, 1.1111112
  %v318 = vmul.f32 %v222, 1.1111112
  %v319 = vmul.f32 %v223, 1.1111112
  %v320 = vmul.f32 %v224, 1.1111112
  %v321 = vmul.f32 %v225, 1.1111112
  %v322 = vmul.f32 %v226, 1.1111112
  %v323 = vmul.f32 %v227, 1.1111112
  %v324 = vmul.f32 %v228, 1.1111112
  %v325 = vmul.f32 %v229, 1.1111112
  %v326 = vmul.f32 %v230, 1.1111112
  %v327 = vmul.f32 %v231, 1.1111112
  %v328 = vmul.f32 %v232, 1.1111112
  %v329 = vmul.f32 %v233, 1.1111112
  %v330 = vmul.f32 %v234, 1.1111112
  %v331 = vmul.f32 %v235, 1.1111112
  %v332 = vmul.f32 %v236, 1.1111112
  %v333 = vmul.f32 %v237, 1.1111112
  %v334 = vmul.f32 %v238, 1.1111112
  %v335 = vmul.f32 %v239, 1.1111112
  %v336 = vmul.f32 %v240, 1.1111112
  %v337 = vmul.f32 %v241, 1.1111112
  %v338 = vmul.f32 %v242, 1.1111112
  %v339 = vmul.f32 %v243, 1.1111112
  %v340 = vmul.f32 %v244, 1.1111112
  %v341 = vmul.f32 %v245, 1.1111112
  %v342 = vmul.f32 %v246, 1.1111112
  %v343 = vmul.f32 %v247, 1.1111112
  %v344 = vmul.f32 %v248, 1.1111112
  %v345 = vmul.f32 %v249, 1.1111112
  %v346 = vmul.f32 %v250, 1.1111112
  %v347 = vmul.f32 %v251, 1.1111112
  %v348 = vmul.f32 %v252, 1.1111112
  %v349 = vmul.f32 %v253, 1.1111112
  %v350 = vmul.f32 %v254, 1.1111112
  %v351 = vmul.f32 %v255, 1.1111112
  %v352 = vmul.f32 %v256, 1.1111112
  %v353 = vmul.f32 %v257, 1.1111112
  %v354 = vmul.f32 %v258, 1.1111112
  %v355 = vmul.f32 %v259, 1.1111112
  %v356 = vmul.f32 %v260, 1.1111112
  %v357 = vmul.f32 %v261, 1.1111112
  %v358 = vmul.f32 %v262, 1.1111112
  %v359 = vmul.f32 %v263, 1.1111112
  %v360 = vmul.f32 %v264, 1.1111112
  %v361 = vmul.f32 %v265, 1.1111112
  %v362 = vmul.f32 %v266, 1.1111112
  %v363 = vmul.f32 %v267, 1.1111112
  %v364 = vmul.f32 %v268, 1.1111112
  %v365 = vmul.f32 %v269, 1.1111112
  %v366 = vmul.f32 %v270, 1.1111112
  %v367 = vmul.f32 %v271, 1.1111112
  %v368 = vmul.f32 %v272, 1.1111112
  %v369 = vmul.f32 %v273, 1.1111112
  %v370 = vmul.f32 %v274, 1.1111112
  %v371 = vmul.f32 %v275, 1.1111112
  %v372 = vmul.f32 %v276, 1.1111112
  %v373 = vmul.f32 %v277, 1.1111112
  %v374 = vmul.f32 %v278, 1.1111112
  %v375 = vmul.f32 %v279, 1.1111112
  %v376 = vmul.f32 %v280, 1.1111112
  %v377 = vmul.f32 %v281, 1.1111112
  %v378 = vmul.f32 %v282, 1.1111112
  %v379 = vmul.f32 %v283, 1.1111112
  %v380 = vmul.f32 %v284, 1.1111112
  %v381 = vmul.f32 %v285, 1.1111112
  %v382 = vmul.f32 %v286, 1.1111112
  %v383 = vmul.f32 %v287, 1.1111112
  %v384 = vmul.f32 %v288, 1.1111112
  %v385 = vmul.f32 %v289, 1.1111112
  %v386 = vmul.f32 %v290, 1.1111112
  %v387 = vmul.f32 %v291, 1.1111112
  %v388 = vmul.f32 %v292, 1.1111112
  %v389 = vmul.f32 %v293, 1.1111112
  %v390 = vmul.f32 %v294, 1.1111112
  %v391 = vmul.f32 %v295, 1.1111112
  %v392 = vmul.f32 %v296, 1.1111112
  %v393 = vmul.f32 %v297, 1.1111112
  %v394 = vmul.f32 %v298, 1.1111112
  %v395 = vmul.f32 %v299, 1.1111112
  %v396 = vmul.f32 %v300, 1.1111112
  %v397 = vmul.f32 %v301, 1.1111112
  %v398 = vsel %vm110, %v302, 0.0
  %v399 = vsel %vm111, %v303, 0.0
  %v400 = vsel %vm112, %v304, 0.0
  %v401 = vsel %vm113, %v305, 0.0
  %v402 = vsel %vm114, %v306, 0.0
  %v403 = vsel %vm115, %v307, 0.0
  %v404 = vsel %vm116, %v308, 0.0
  %v405 = vsel %vm117, %v309, 0.0
  %v406 = vsel %vm118, %v310, 0.0
  %v407 = vsel %vm119, %v311, 0.0
  %v408 = vsel %vm120, %v312, 0.0
  %v409 = vsel %vm121, %v313, 0.0
  %v410 = vsel %vm122, %v314, 0.0
  %v411 = vsel %vm123, %v315, 0.0
  %v412 = vsel %vm124, %v316, 0.0
  %v413 = vsel %vm125, %v317, 0.0
  %v414 = vsel %vm126, %v318, 0.0
  %v415 = vsel %vm127, %v319, 0.0
  %v416 = vsel %vm128, %v320, 0.0
  %v417 = vsel %vm129, %v321, 0.0
  %v418 = vsel %vm130, %v322, 0.0
  %v419 = vsel %vm131, %v323, 0.0
  %v420 = vsel %vm132, %v324, 0.0
  %v421 = vsel %vm133, %v325, 0.0
  %v422 = vsel %vm134, %v326, 0.0
  %v423 = vsel %vm135, %v327, 0.0
  %v424 = vsel %vm136, %v328, 0.0
  %v425 = vsel %vm137, %v329, 0.0
  %v426 = vsel %vm138, %v330, 0.0
  %v427 = vsel %vm139, %v331, 0.0
  %v428 = vsel %vm140, %v332, 0.0
  %v429 = vsel %vm141, %v333, 0.0
  %v430 = vsel %vm142, %v334, 0.0
  %v431 = vsel %vm143, %v335, 0.0
  %v432 = vsel %vm144, %v336, 0.0
  %v433 = vsel %vm145, %v337, 0.0
  %v434 = vsel %vm146, %v338, 0.0
  %v435 = vsel %vm147, %v339, 0.0
  %v436 = vsel %vm148, %v340, 0.0
  %v437 = vsel %vm149, %v341, 0.0
  %v438 = vsel %vm150, %v342, 0.0
  %v439 = vsel %vm151, %v343, 0.0
  %v440 = vsel %vm152, %v344, 0.0
  %v441 = vsel %vm153, %v345, 0.0
  %v442 = vsel %vm154, %v346, 0.0
  %v443 = vsel %vm155, %v347, 0.0
  %v444 = vsel %vm156, %v348, 0.0
  %v445 = vsel %vm157, %v349, 0.0
  %v446 = vsel %vm158, %v350, 0.0
  %v447 = vsel %vm159, %v351, 0.0
  %v448 = vsel %vm160, %v352, 0.0
  %v449 = vsel %vm161, %v353, 0.0
  %v450 = vsel %vm162, %v354, 0.0
  %v451 = vsel %vm163, %v355, 0.0
  %v452 = vsel %vm164, %v356, 0.0
  %v453 = vsel %vm165, %v357, 0.0
  %v454 = vsel %vm166, %v358, 0.0
  %v455 = vsel %vm167, %v359, 0.0
  %v456 = vsel %vm168, %v360, 0.0
  %v457 = vsel %vm169, %v361, 0.0
  %v458 = vsel %vm170, %v362, 0.0
  %v459 = vsel %vm171, %v363, 0.0
  %v460 = vsel %vm172, %v364, 0.0
  %v461 = vsel %vm173, %v365, 0.0
  %v462 = vsel %vm174, %v366, 0.0
  %v463 = vsel %vm175, %v367, 0.0
  %v464 = vsel %vm176, %v368, 0.0
  %v465 = vsel %vm177, %v369, 0.0
  %v466 = vsel %vm178, %v370, 0.0
  %v467 = vsel %vm179, %v371, 0.0
  %v468 = vsel %vm180, %v372, 0.0
  %v469 = vsel %vm181, %v373, 0.0
  %v470 = vsel %vm182, %v374, 0.0
  %v471 = vsel %vm183, %v375, 0.0
  %v472 = vsel %vm184, %v376, 0.0
  %v473 = vsel %vm185, %v377, 0.0
  %v474 = vsel %vm186, %v378, 0.0
  %v475 = vsel %vm187, %v379, 0.0
  %v476 = vsel %vm188, %v380, 0.0
  %v477 = vsel %vm189, %v381, 0.0
  %v478 = vsel %vm190, %v382, 0.0
  %v479 = vsel %vm191, %v383, 0.0
  %v480 = vsel %vm192, %v384, 0.0
  %v481 = vsel %vm193, %v385, 0.0
  %v482 = vsel %vm194, %v386, 0.0
  %v483 = vsel %vm195, %v387, 0.0
  %v484 = vsel %vm196, %v388, 0.0
  %v485 = vsel %vm197, %v389, 0.0
  %v486 = vsel %vm198, %v390, 0.0
  %v487 = vsel %vm199, %v391, 0.0
  %v488 = vsel %vm200, %v392, 0.0
  %v489 = vsel %vm201, %v393, 0.0
  %v490 = vsel %vm202, %v394, 0.0
  %v491 = vsel %vm203, %v395, 0.0
  %v492 = vsel %vm204, %v396, 0.0
  %v493 = vsel %vm205, %v397, 0.0
  %v494 = vld [vmem:[%s1] sm:$0xff]
  %v495 = vld [vmem:[%s1 + $0x8] sm:$0xff]
  %v496 = vld [vmem:[%s1 + $0x10] sm:$0xff]
  %v497 = vld [vmem:[%s1 + $0x18] sm:$0xff]
  %v498 = vld [vmem:[%s1 + $0x20] sm:$0xff]
  %v499 = vld [vmem:[%s1 + $0x28] sm:$0xff]
  %v500 = vld [vmem:[%s1 + $0x30] sm:$0xff]
  %v501 = vld [vmem:[%s1 + $0x38] sm:$0xff]
  %v502 = vld [vmem:[%s1 + $0x40] sm:$0xff]
  %v503 = vld [vmem:[%s1 + $0x48] sm:$0xff]
  %v504 = vld [vmem:[%s1 + $0x50] sm:$0xff]
  %v505 = vld [vmem:[%s1 + $0x58] sm:$0xff]
  %v506 = vld [vmem:[%s1 + $0x60] sm:$0xff]
  %v507 = vld [vmem:[%s1 + $0x68] sm:$0xff]
  %v508 = vld [vmem:[%s1 + $0x70] sm:$0xff]
  %v509 = vld [vmem:[%s1 + $0x78] sm:$0xff]
  %v510 = vld [vmem:[%s1 + $0x80] sm:$0xff]
  %v511 = vld [vmem:[%s1 + $0x88] sm:$0xff]
  %v512 = vld [vmem:[%s1 + $0x90] sm:$0xff]
  %v513 = vld [vmem:[%s1 + $0x98] sm:$0xff]
  %v514 = vld [vmem:[%s1 + $0xa0] sm:$0xff]
  %v515 = vld [vmem:[%s1 + $0xa8] sm:$0xff]
  %v516 = vld [vmem:[%s1 + $0xb0] sm:$0xff]
  %v517 = vld [vmem:[%s1 + $0xb8] sm:$0xff]
  %v518 = vld [vmem:[%s1 + $0xc0] sm:$0xff]
  %v519 = vld [vmem:[%s1 + $0xc8] sm:$0xff]
  %v520 = vld [vmem:[%s1 + $0xd0] sm:$0xff]
  %v521 = vld [vmem:[%s1 + $0xd8] sm:$0xff]
  %v522 = vld [vmem:[%s1 + $0xe0] sm:$0xff]
  %v523 = vld [vmem:[%s1 + $0xe8] sm:$0xff]
  %v524 = vld [vmem:[%s1 + $0xf0] sm:$0xff]
  %v525 = vld [vmem:[%s1 + $0xf8] sm:$0xff]
  %v526 = vld [vmem:[%s1 + $0x100] sm:$0xff]
  %v527 = vld [vmem:[%s1 + $0x108] sm:$0xff]
  %v528 = vld [vmem:[%s1 + $0x110] sm:$0xff]
  %v529 = vld [vmem:[%s1 + $0x118] sm:$0xff]
  %v530 = vld [vmem:[%s1 + $0x120] sm:$0xff]
  %v531 = vld [vmem:[%s1 + $0x128] sm:$0xff]
  %v532 = vld [vmem:[%s1 + $0x130] sm:$0xff]
  %v533 = vld [vmem:[%s1 + $0x138] sm:$0xff]
  %v534 = vld [vmem:[%s1 + $0x140] sm:$0xff]
  %v535 = vld [vmem:[%s1 + $0x148] sm:$0xff]
  %v536 = vld [vmem:[%s1 + $0x150] sm:$0xff]
  %v537 = vld [vmem:[%s1 + $0x158] sm:$0xff]
  %v538 = vld [vmem:[%s1 + $0x160] sm:$0xff]
  %v539 = vld [vmem:[%s1 + $0x168] sm:$0xff]
  %v540 = vld [vmem:[%s1 + $0x170] sm:$0xff]
  %v541 = vld [vmem:[%s1 + $0x178] sm:$0xff]
  %v542 = vld [vmem:[%s1 + $0x180] sm:$0xff]
  %v543 = vld [vmem:[%s1 + $0x188] sm:$0xff]
  %v544 = vld [vmem:[%s1 + $0x190] sm:$0xff]
  %v545 = vld [vmem:[%s1 + $0x198] sm:$0xff]
  %v546 = vld [vmem:[%s1 + $0x1a0] sm:$0xff]
  %v547 = vld [vmem:[%s1 + $0x1a8] sm:$0xff]
  %v548 = vld [vmem:[%s1 + $0x1b0] sm:$0xff]
  %v549 = vld [vmem:[%s1 + $0x1b8] sm:$0xff]
  %v550 = vld [vmem:[%s1 + $0x1c0] sm:$0xff]
  %v551 = vld [vmem:[%s1 + $0x1c8] sm:$0xff]
  %v552 = vld [vmem:[%s1 + $0x1d0] sm:$0xff]
  %v553 = vld [vmem:[%s1 + $0x1d8] sm:$0xff]
  %v554 = vld [vmem:[%s1 + $0x1e0] sm:$0xff]
  %v555 = vld [vmem:[%s1 + $0x1e8] sm:$0xff]
  %v556 = vld [vmem:[%s1 + $0x1f0] sm:$0xff]
  %v557 = vld [vmem:[%s1 + $0x1f8] sm:$0xff]
  %v558 = vld [vmem:[%s1 + $0x200] sm:$0xff]
  %v559 = vld [vmem:[%s1 + $0x208] sm:$0xff]
  %v560 = vld [vmem:[%s1 + $0x210] sm:$0xff]
  %v561 = vld [vmem:[%s1 + $0x218] sm:$0xff]
  %v562 = vld [vmem:[%s1 + $0x220] sm:$0xff]
  %v563 = vld [vmem:[%s1 + $0x228] sm:$0xff]
  %v564 = vld [vmem:[%s1 + $0x230] sm:$0xff]
  %v565 = vld [vmem:[%s1 + $0x238] sm:$0xff]
  %v566 = vld [vmem:[%s1 + $0x240] sm:$0xff]
  %v567 = vld [vmem:[%s1 + $0x248] sm:$0xff]
  %v568 = vld [vmem:[%s1 + $0x250] sm:$0xff]
  %v569 = vld [vmem:[%s1 + $0x258] sm:$0xff]
  %v570 = vld [vmem:[%s1 + $0x260] sm:$0xff]
  %v571 = vld [vmem:[%s1 + $0x268] sm:$0xff]
  %v572 = vld [vmem:[%s1 + $0x270] sm:$0xff]
  %v573 = vld [vmem:[%s1 + $0x278] sm:$0xff]
  %v574 = vld [vmem:[%s1 + $0x280] sm:$0xff]
  %v575 = vld [vmem:[%s1 + $0x288] sm:$0xff]
  %v576 = vld [vmem:[%s1 + $0x290] sm:$0xff]
  %v577 = vld [vmem:[%s1 + $0x298] sm:$0xff]
  %v578 = vld [vmem:[%s1 + $0x2a0] sm:$0xff]
  %v579 = vld [vmem:[%s1 + $0x2a8] sm:$0xff]
  %v580 = vld [vmem:[%s1 + $0x2b0] sm:$0xff]
  %v581 = vld [vmem:[%s1 + $0x2b8] sm:$0xff]
  %v582 = vld [vmem:[%s1 + $0x2c0] sm:$0xff]
  %v583 = vld [vmem:[%s1 + $0x2c8] sm:$0xff]
  %v584 = vld [vmem:[%s1 + $0x2d0] sm:$0xff]
  %v585 = vld [vmem:[%s1 + $0x2d8] sm:$0xff]
  %v586 = vld [vmem:[%s1 + $0x2e0] sm:$0xff]
  %v587 = vld [vmem:[%s1 + $0x2e8] sm:$0xff]
  %v588 = vld [vmem:[%s1 + $0x2f0] sm:$0xff]
  %v589 = vld [vmem:[%s1 + $0x2f8] sm:$0xff]
  %v590 = vadd.f32 %v398, %v494
  %v591 = vadd.f32 %v399, %v495
  %v592 = vadd.f32 %v400, %v496
  %v593 = vadd.f32 %v401, %v497
  %v594 = vadd.f32 %v402, %v498
  %v595 = vadd.f32 %v403, %v499
  %v596 = vadd.f32 %v404, %v500
  %v597 = vadd.f32 %v405, %v501
  %v598 = vadd.f32 %v406, %v502
  %v599 = vadd.f32 %v407, %v503
  %v600 = vadd.f32 %v408, %v504
  %v601 = vadd.f32 %v409, %v505
  %v602 = vadd.f32 %v410, %v506
  %v603 = vadd.f32 %v411, %v507
  %v604 = vadd.f32 %v412, %v508
  %v605 = vadd.f32 %v413, %v509
  %v606 = vadd.f32 %v414, %v510
  %v607 = vadd.f32 %v415, %v511
  %v608 = vadd.f32 %v416, %v512
  %v609 = vadd.f32 %v417, %v513
  %v610 = vadd.f32 %v418, %v514
  %v611 = vadd.f32 %v419, %v515
  %v612 = vadd.f32 %v420, %v516
  %v613 = vadd.f32 %v421, %v517
  %v614 = vadd.f32 %v422, %v518
  %v615 = vadd.f32 %v423, %v519
  %v616 = vadd.f32 %v424, %v520
  %v617 = vadd.f32 %v425, %v521
  %v618 = vadd.f32 %v426, %v522
  %v619 = vadd.f32 %v427, %v523
  %v620 = vadd.f32 %v428, %v524
  %v621 = vadd.f32 %v429, %v525
  %v622 = vadd.f32 %v430, %v526
  %v623 = vadd.f32 %v431, %v527
  %v624 = vadd.f32 %v432, %v528
  %v625 = vadd.f32 %v433, %v529
  %v626 = vadd.f32 %v434, %v530
  %v627 = vadd.f32 %v435, %v531
  %v628 = vadd.f32 %v436, %v532
  %v629 = vadd.f32 %v437, %v533
  %v630 = vadd.f32 %v438, %v534
  %v631 = vadd.f32 %v439, %v535
  %v632 = vadd.f32 %v440, %v536
  %v633 = vadd.f32 %v441, %v537
  %v634 = vadd.f32 %v442, %v538
  %v635 = vadd.f32 %v443, %v539
  %v636 = vadd.f32 %v444, %v540
  %v637 = vadd.f32 %v445, %v541
  %v638 = vadd.f32 %v446, %v542
  %v639 = vadd.f32 %v447, %v543
  %v640 = vadd.f32 %v448, %v544
  %v641 = vadd.f32 %v449, %v545
  %v642 = vadd.f32 %v450, %v546
  %v643 = vadd.f32 %v451, %v547
  %v644 = vadd.f32 %v452, %v548
  %v645 = vadd.f32 %v453, %v549
  %v646 = vadd.f32 %v454, %v550
  %v647 = vadd.f32 %v455, %v551
  %v648 = vadd.f32 %v456, %v552
  %v649 = vadd.f32 %v457, %v553
  %v650 = vadd.f32 %v458, %v554
  %v651 = vadd.f32 %v459, %v555
  %v652 = vadd.f32 %v460, %v556
  %v653 = vadd.f32 %v461, %v557
  %v654 = vadd.f32 %v462, %v558
  %v655 = vadd.f32 %v463, %v559
  %v656 = vadd.f32 %v464, %v560
  %v657 = vadd.f32 %v465, %v561
  %v658 = vadd.f32 %v466, %v562
  %v659 = vadd.f32 %v467, %v563
  %v660 = vadd.f32 %v468, %v564
  %v661 = vadd.f32 %v469, %v565
  %v662 = vadd.f32 %v470, %v566
  %v663 = vadd.f32 %v471, %v567
  %v664 = vadd.f32 %v472, %v568
  %v665 = vadd.f32 %v473, %v569
  %v666 = vadd.f32 %v474, %v570
  %v667 = vadd.f32 %v475, %v571
  %v668 = vadd.f32 %v476, %v572
  %v669 = vadd.f32 %v477, %v573
  %v670 = vadd.f32 %v478, %v574
  %v671 = vadd.f32 %v479, %v575
  %v672 = vadd.f32 %v480, %v576
  %v673 = vadd.f32 %v481, %v577
  %v674 = vadd.f32 %v482, %v578
  %v675 = vadd.f32 %v483, %v579
  %v676 = vadd.f32 %v484, %v580
  %v677 = vadd.f32 %v485, %v581
  %v678 = vadd.f32 %v486, %v582
  %v679 = vadd.f32 %v487, %v583
  %v680 = vadd.f32 %v488, %v584
  %v681 = vadd.f32 %v489, %v585
  %v682 = vadd.f32 %v490, %v586
  %v683 = vadd.f32 %v491, %v587
  %v684 = vadd.f32 %v492, %v588
  %v685 = vadd.f32 %v493, %v589
  %686 = vst [vmem:[%s3] sm:$0xff] %v590
  %687 = vst [vmem:[%s3 + $0x8] sm:$0xff] %v591
  %688 = vst [vmem:[%s3 + $0x10] sm:$0xff] %v592
  %689 = vst [vmem:[%s3 + $0x18] sm:$0xff] %v593
  %690 = vst [vmem:[%s3 + $0x20] sm:$0xff] %v594
  %691 = vst [vmem:[%s3 + $0x28] sm:$0xff] %v595
  %692 = vst [vmem:[%s3 + $0x30] sm:$0xff] %v596
  %693 = vst [vmem:[%s3 + $0x38] sm:$0xff] %v597
  %694 = vst [vmem:[%s3 + $0x40] sm:$0xff] %v598
  %695 = vst [vmem:[%s3 + $0x48] sm:$0xff] %v599
  %696 = vst [vmem:[%s3 + $0x50] sm:$0xff] %v600
  %697 = vst [vmem:[%s3 + $0x58] sm:$0xff] %v601
  %698 = vst [vmem:[%s3 + $0x60] sm:$0xff] %v602
  %699 = vst [vmem:[%s3 + $0x68] sm:$0xff] %v603
  %700 = vst [vmem:[%s3 + $0x70] sm:$0xff] %v604
  %701 = vst [vmem:[%s3 + $0x78] sm:$0xff] %v605
  %702 = vst [vmem:[%s3 + $0x80] sm:$0xff] %v606
  %703 = vst [vmem:[%s3 + $0x88] sm:$0xff] %v607
  %704 = vst [vmem:[%s3 + $0x90] sm:$0xff] %v608
  %705 = vst [vmem:[%s3 + $0x98] sm:$0xff] %v609
  %706 = vst [vmem:[%s3 + $0xa0] sm:$0xff] %v610
  %707 = vst [vmem:[%s3 + $0xa8] sm:$0xff] %v611
  %708 = vst [vmem:[%s3 + $0xb0] sm:$0xff] %v612
  %709 = vst [vmem:[%s3 + $0xb8] sm:$0xff] %v613
  %710 = vst [vmem:[%s3 + $0xc0] sm:$0xff] %v614
  %711 = vst [vmem:[%s3 + $0xc8] sm:$0xff] %v615
  %712 = vst [vmem:[%s3 + $0xd0] sm:$0xff] %v616
  %713 = vst [vmem:[%s3 + $0xd8] sm:$0xff] %v617
  %714 = vst [vmem:[%s3 + $0xe0] sm:$0xff] %v618
  %715 = vst [vmem:[%s3 + $0xe8] sm:$0xff] %v619
  %716 = vst [vmem:[%s3 + $0xf0] sm:$0xff] %v620
  %717 = vst [vmem:[%s3 + $0xf8] sm:$0xff] %v621
  %718 = vst [vmem:[%s3 + $0x100] sm:$0xff] %v622
  %719 = vst [vmem:[%s3 + $0x108] sm:$0xff] %v623
  %720 = vst [vmem:[%s3 + $0x110] sm:$0xff] %v624
  %721 = vst [vmem:[%s3 + $0x118] sm:$0xff] %v625
  %722 = vst [vmem:[%s3 + $0x120] sm:$0xff] %v626
  %723 = vst [vmem:[%s3 + $0x128] sm:$0xff] %v627
  %724 = vst [vmem:[%s3 + $0x130] sm:$0xff] %v628
  %725 = vst [vmem:[%s3 + $0x138] sm:$0xff] %v629
  %726 = vst [vmem:[%s3 + $0x140] sm:$0xff] %v630
  %727 = vst [vmem:[%s3 + $0x148] sm:$0xff] %v631
  %728 = vst [vmem:[%s3 + $0x150] sm:$0xff] %v632
  %729 = vst [vmem:[%s3 + $0x158] sm:$0xff] %v633
  %730 = vst [vmem:[%s3 + $0x160] sm:$0xff] %v634
  %731 = vst [vmem:[%s3 + $0x168] sm:$0xff] %v635
  %732 = vst [vmem:[%s3 + $0x170] sm:$0xff] %v636
  %733 = vst [vmem:[%s3 + $0x178] sm:$0xff] %v637
  %734 = vst [vmem:[%s3 + $0x180] sm:$0xff] %v638
  %735 = vst [vmem:[%s3 + $0x188] sm:$0xff] %v639
  %736 = vst [vmem:[%s3 + $0x190] sm:$0xff] %v640
  %737 = vst [vmem:[%s3 + $0x198] sm:$0xff] %v641
  %738 = vst [vmem:[%s3 + $0x1a0] sm:$0xff] %v642
  %739 = vst [vmem:[%s3 + $0x1a8] sm:$0xff] %v643
  %740 = vst [vmem:[%s3 + $0x1b0] sm:$0xff] %v644
  %741 = vst [vmem:[%s3 + $0x1b8] sm:$0xff] %v645
  %742 = vst [vmem:[%s3 + $0x1c0] sm:$0xff] %v646
  %743 = vst [vmem:[%s3 + $0x1c8] sm:$0xff] %v647
  %744 = vst [vmem:[%s3 + $0x1d0] sm:$0xff] %v648
  %745 = vst [vmem:[%s3 + $0x1d8] sm:$0xff] %v649
  %746 = vst [vmem:[%s3 + $0x1e0] sm:$0xff] %v650
  %747 = vst [vmem:[%s3 + $0x1e8] sm:$0xff] %v651
  %748 = vst [vmem:[%s3 + $0x1f0] sm:$0xff] %v652
  %749 = vst [vmem:[%s3 + $0x1f8] sm:$0xff] %v653
  %750 = vst [vmem:[%s3 + $0x200] sm:$0xff] %v654
  %751 = vst [vmem:[%s3 + $0x208] sm:$0xff] %v655
  %752 = vst [vmem:[%s3 + $0x210] sm:$0xff] %v656
  %753 = vst [vmem:[%s3 + $0x218] sm:$0xff] %v657
  %754 = vst [vmem:[%s3 + $0x220] sm:$0xff] %v658
  %755 = vst [vmem:[%s3 + $0x228] sm:$0xff] %v659
  %756 = vst [vmem:[%s3 + $0x230] sm:$0xff] %v660
  %757 = vst [vmem:[%s3 + $0x238] sm:$0xff] %v661
  %758 = vst [vmem:[%s3 + $0x240] sm:$0xff] %v662
  %759 = vst [vmem:[%s3 + $0x248] sm:$0xff] %v663
  %760 = vst [vmem:[%s3 + $0x250] sm:$0xff] %v664
  %761 = vst [vmem:[%s3 + $0x258] sm:$0xff] %v665
  %762 = vst [vmem:[%s3 + $0x260] sm:$0xff] %v666
  %763 = vst [vmem:[%s3 + $0x268] sm:$0xff] %v667
  %764 = vst [vmem:[%s3 + $0x270] sm:$0xff] %v668
  %765 = vst [vmem:[%s3 + $0x278] sm:$0xff] %v669
  %766 = vst [vmem:[%s3 + $0x280] sm:$0xff] %v670
  %767 = vst [vmem:[%s3 + $0x288] sm:$0xff] %v671
  %768 = vst [vmem:[%s3 + $0x290] sm:$0xff] %v672
  %769 = vst [vmem:[%s3 + $0x298] sm:$0xff] %v673
  %770 = vst [vmem:[%s3 + $0x2a0] sm:$0xff] %v674
  %771 = vst [vmem:[%s3 + $0x2a8] sm:$0xff] %v675
  %772 = vst [vmem:[%s3 + $0x2b0] sm:$0xff] %v676
  %773 = vst [vmem:[%s3 + $0x2b8] sm:$0xff] %v677
  %774 = vst [vmem:[%s3 + $0x2c0] sm:$0xff] %v678
  %775 = vst [vmem:[%s3 + $0x2c8] sm:$0xff] %v679
  %776 = vst [vmem:[%s3 + $0x2d0] sm:$0xff] %v680
  %777 = vst [vmem:[%s3 + $0x2d8] sm:$0xff] %v681
  %778 = vst [vmem:[%s3 + $0x2e0] sm:$0xff] %v682
  %779 = vst [vmem:[%s3 + $0x2e8] sm:$0xff] %v683
  %780 = vst [vmem:[%s3 + $0x2f0] sm:$0xff] %v684
  %781 = vst [vmem:[%s3 + $0x2f8] sm:$0xff] %v685
  // Predicated region
  $region14: #{dropout_add.1} parent=0 // pred_check
    _
  $region15: #{dropout_add.1} parent=0 // pred_check_branch
    %783 = sbr.rel (0) target = $region17
  $region16: #{dropout_add.1} parent=0 // pred_region
    _
  $region17: #{dropout_add.1} parent=0 // pred_fallthru
    _
  // Predicated region
  $region18: #{dropout_add.1} parent=0 // pred_check
    _
  $region19: #{dropout_add.1} parent=0 // pred_check_branch
    %785 = sbr.rel (0) target = $region21
  $region20: #{dropout_add.1} parent=0 // pred_region
    _
  $region21: #{dropout_add.1} parent=0 // pred_fallthru
    _

</llo_original>
